<compile_context>
chip_gen: v6e
topology: v6e:2x2x1
jax: 0.10.0
libtpu: 0.0.40
codegen_flags: <defaults>
</compile_context>

<pallas_src>
import functools

import jax
import jax.numpy as jnp
from jax.experimental import pallas as pl
from jax.experimental.pallas import tpu as pltpu


def _round_up(x, m):
    return ((x + m - 1) // m) * m


def _critic_kernel(x_ref, w1_ref, b1_ref, w2s_ref, w2a_ref, b2_ref,
                   w3t_ref, b3_ref, out_ref):
    x = x_ref[...]                                           # (TB, S+A) bf16

    # fc1 + ReLU  (action rows of w1p are zero => exactly state @ W1)
    h1 = jnp.dot(x, w1_ref[...],
                 preferred_element_type=jnp.float32) + b1_ref[...]
    h1 = jnp.maximum(h1, 0.0).astype(jnp.bfloat16)           # (TB, H1)

    # cat([h1, action]) @ W2  ==  h1 @ W2s + x @ W2a_padded
    h2 = (jnp.dot(h1, w2s_ref[...], preferred_element_type=jnp.float32)
          + jnp.dot(x, w2a_ref[...], preferred_element_type=jnp.float32)
          + b2_ref[...])
    h2 = jnp.maximum(h2, 0.0).astype(jnp.bfloat16)           # (TB, H2)

    # fc3, computed transposed so batch lands on the lane axis -> (1, TB)
    q = jnp.einsum("oh,bh->ob", w3t_ref[...], h2,
                   preferred_element_type=jnp.float32) + b3_ref[...]
    out_ref[...] = q[None, :, :].astype(out_ref.dtype)       # (1, 1, TB)


def prepare_critic_params(params, state_dim, action_dim):
    """One-time prep: split/pad/cast weights for the fused-input kernel."""
    w1, b1, w2, b2, w3, b3 = (params["w1"], params["b1"], params["w2"],
                              params["b2"], params["w3"], params["b3"])
    hidden1 = w1.shape[1]
    hidden2 = w2.shape[1]
    sa = state_dim + action_dim
    # fc1 weight padded with zero rows for the action part of the fused input.
    w1p = jnp.zeros((sa, hidden1), jnp.float32).at[:state_dim].set(w1)
    # fc2 weight split: h1 rows kept as-is, action rows padded to fused width.
    w2s = w2[:hidden1]
    w2ap = jnp.zeros((sa, hidden2), jnp.float32).at[state_dim:].set(w2[hidden1:])
    return dict(
        w1p=w1p.astype(jnp.bfloat16),
        b1=b1.astype(jnp.float32),
        w2s=w2s.astype(jnp.bfloat16),
        w2ap=w2ap.astype(jnp.bfloat16),
        b2=b2.astype(jnp.float32),
        w3t=jnp.transpose(w3).astype(jnp.bfloat16),   # (1, hidden2)
        b3=b3.astype(jnp.float32),                    # (1, 1)
    )


def critic_forward(state, action, prep, *, tile_batch=None):
    """Critic forward pass as a single batch-tiled Pallas kernel."""
    B, S = state.shape
    A = action.shape[1]
    sa = S + A

    if tile_batch is None:
        tile_batch = 512
    TB = _round_up(min(tile_batch, _round_up(B, 8)), 8)
    B_pad = _round_up(B, TB)
    nt = B_pad // TB

    x = jnp.concatenate([state, action], axis=-1).astype(jnp.bfloat16)
    if B_pad != B:
        x = jnp.pad(x, ((0, B_pad - B), (0, 0)))

    # Weights/biases: full-array blocks, constant index_map -> VMEM-resident
    # across the whole grid (never re-DMA'd).
    def full(arr):
        return pl.BlockSpec(arr.shape, lambda i: (0,) * arr.ndim)

    out = pl.pallas_call(
        _critic_kernel,
        out_shape=jax.ShapeDtypeStruct((nt, 1, TB), jnp.float32),
        grid_spec=pltpu.PrefetchScalarGridSpec(
            num_scalar_prefetch=0,
            grid=(nt,),
            in_specs=[
                pl.BlockSpec((TB, sa), lambda i: (i, 0)),      # fused input
                full(prep["w1p"]), full(prep["b1"]),
                full(prep["w2s"]), full(prep["w2ap"]), full(prep["b2"]),
                full(prep["w3t"]), full(prep["b3"]),
            ],
            out_specs=pl.BlockSpec((1, 1, TB), lambda i: (i, 0, 0)),
        ),
        compiler_params=pltpu.CompilerParams(
            dimension_semantics=("parallel",)),   # megacore split on v7x
    )(x, prep["w1p"], prep["b1"], prep["w2s"], prep["w2ap"], prep["b2"],
      prep["w3t"], prep["b3"])

    # (nt, 1, TB) -> (B, 1), dropping batch padding.
    return out.reshape(B_pad)[:B].reshape(B, 1)


def init_critic_params(key, state_dim, action_dim, hidden1, hidden2,
                       init_w=0.003):
    """Fan-in uniform init mirroring Critic.init_weights (f32 master weights).

    Note: uses classical input-dim fan-in; only affects the random init
    distribution, not the forward semantics of the kernel.
    """
    ks = jax.random.split(key, 6)

    def fanin_uniform(k, shape, fanin):
        v = 1.0 / jnp.sqrt(jnp.float32(fanin))
        return jax.random.uniform(k, shape, jnp.float32, -v, v)

    w1 = fanin_uniform(ks[0], (state_dim, hidden1), state_dim)
    b1 = fanin_uniform(ks[1], (1, hidden1), state_dim)
    w2 = fanin_uniform(ks[2], (hidden1 + action_dim, hidden2),
                       hidden1 + action_dim)
    b2 = fanin_uniform(ks[3], (1, hidden2), hidden1 + action_dim)
    w3 = jax.random.uniform(ks[4], (hidden2, 1), jnp.float32, -init_w, init_w)
    b3 = jax.random.uniform(ks[5], (1, 1), jnp.float32, -init_w, init_w)
    return dict(w1=w1, b1=b1, w2=w2, b2=b2, w3=w3, b3=b3)


def critic_ref_bf16(state, action, prep):
    """Pure-JAX reference with the same bf16 quantization / f32 accumulation."""
    x = jnp.concatenate([state, action], axis=-1).astype(jnp.bfloat16)
    h1 = jnp.maximum(
        jnp.dot(x, prep["w1p"], preferred_element_type=jnp.float32)
        + prep["b1"], 0.0).astype(jnp.bfloat16)
    h2 = jnp.maximum(
        jnp.dot(h1, prep["w2s"], preferred_element_type=jnp.float32)
        + jnp.dot(x, prep["w2ap"], preferred_element_type=jnp.float32)
        + prep["b2"], 0.0).astype(jnp.bfloat16)
    return (jnp.dot(h2, jnp.transpose(prep["w3t"]),
                    preferred_element_type=jnp.float32) + prep["b3"])


def critic_ref_f32(state, action, p):
    """Exact f32 mirror of the PyTorch forward (for semantic sanity)."""
    h1 = jnp.maximum(state @ p["w1"] + p["b1"], 0.0)
    h2 = jnp.maximum(jnp.concatenate([h1, action], axis=-1) @ p["w2"]
                     + p["b2"], 0.0)
    return h2 @ p["w3"] + p["b3"]


if __name__ == "__main__":
    # Small shapes consistent with Critic(state_dim, action_dim, hidden1, hidden2).
    B, state_dim, action_dim, hidden1, hidden2 = 24, 16, 8, 64, 32

    key = jax.random.PRNGKey(0)
    kp, ks, ka = jax.random.split(key, 3)

    params = init_critic_params(kp, state_dim, action_dim, hidden1, hidden2)
    prep = prepare_critic_params(params, state_dim, action_dim)

    state = jax.random.normal(ks, (B, state_dim), jnp.float32)
    action = jax.random.normal(ka, (B, action_dim), jnp.float32)

    # tile_batch=8 at this tiny B so the demo actually exercises a multi-step
    # grid (3 tiles); production usage would leave the default (up to 512).
    fwd = jax.jit(functools.partial(critic_forward, tile_batch=8))
    out = jax.block_until_ready(fwd(state, action, prep))

    ref = critic_ref_bf16(state, action, prep)
    _ = critic_ref_f32(state, action, params)   # semantic reference (f32 weights)

    assert out.shape == (B, 1)
    assert jnp.allclose(out, ref, atol=1e-3, rtol=1e-2), (
        float(jnp.max(jnp.abs(out - ref))))

    print("KERNEL_OK")
</pallas_src>

<mosaic_0001>
module attributes {stable_mosaic.version = 11 : i64} {
  func.func @_critic_kernel(%arg0: i32, %arg1: memref<8x24xbf16, #tpu.memory_space<vmem>>, %arg2: memref<24x64xbf16, #tpu.memory_space<vmem>>, %arg3: memref<1x64xf32, #tpu.memory_space<vmem>>, %arg4: memref<64x32xbf16, #tpu.memory_space<vmem>>, %arg5: memref<24x32xbf16, #tpu.memory_space<vmem>>, %arg6: memref<1x32xf32, #tpu.memory_space<vmem>>, %arg7: memref<1x32xbf16, #tpu.memory_space<vmem>>, %arg8: memref<1x1xf32, #tpu.memory_space<vmem>>, %arg9: memref<1x1x8xf32, #tpu.memory_space<vmem>>) attributes {dimension_semantics = [#tpu.dimension_semantics<parallel>], iteration_bounds = array<i64: 3>, scalar_prefetch = 0 : i64, scratch_operands = 0 : i64, tpu.core_type = #tpu.core_type<tc>, window_params = [{transform_indices = @transform_0, window_bounds = array<i64: 8, 24>}, {pipeline_mode = #tpu.pipeline_mode<synchronous>, transform_indices = @transform_1, window_bounds = array<i64: 24, 64>}, {pipeline_mode = #tpu.pipeline_mode<synchronous>, transform_indices = @transform_2, window_bounds = array<i64: 1, 64>}, {pipeline_mode = #tpu.pipeline_mode<synchronous>, transform_indices = @transform_3, window_bounds = array<i64: 64, 32>}, {pipeline_mode = #tpu.pipeline_mode<synchronous>, transform_indices = @transform_4, window_bounds = array<i64: 24, 32>}, {pipeline_mode = #tpu.pipeline_mode<synchronous>, transform_indices = @transform_5, window_bounds = array<i64: 1, 32>}, {pipeline_mode = #tpu.pipeline_mode<synchronous>, transform_indices = @transform_6, window_bounds = array<i64: 1, 32>}, {pipeline_mode = #tpu.pipeline_mode<synchronous>, transform_indices = @transform_7, window_bounds = array<i64: 1, 1>}, {transform_indices = @transform_8, window_bounds = array<i64: 1, 1, 8>}]} {
    %c0 = arith.constant 0 : index
    %c0_0 = arith.constant 0 : index
    %0 = vector.load %arg1[%c0, %c0_0] : memref<8x24xbf16, #tpu.memory_space<vmem>>, vector<8x24xbf16>
    %c0_1 = arith.constant 0 : index
    %c0_2 = arith.constant 0 : index
    %1 = vector.load %arg2[%c0_1, %c0_2] : memref<24x64xbf16, #tpu.memory_space<vmem>>, vector<24x64xbf16>
    %cst = arith.constant dense<0.000000e+00> : vector<8x64xf32>
    %2 = tpu.matmul %0, %1, %cst {dimension_numbers = #tpu.dot_dimension_numbers<[1], [0], [0], [1], [0, 0, 1, 1], [], []>} : vector<8x24xbf16>, vector<24x64xbf16>, vector<8x64xf32> -> vector<8x64xf32>
    %c0_3 = arith.constant 0 : index
    %c0_4 = arith.constant 0 : index
    %3 = vector.load %arg3[%c0_3, %c0_4] : memref<1x64xf32, #tpu.memory_space<vmem>>, vector<1x64xf32>
    %4 = vector.broadcast %3 : vector<1x64xf32> to vector<8x64xf32>
    %5 = arith.addf %2, %4 : vector<8x64xf32>
    %cst_5 = arith.constant 0.000000e+00 : f32
    %6 = vector.broadcast %cst_5 : f32 to vector<8x64xf32>
    %7 = arith.maximumf %5, %6 : vector<8x64xf32>
    %8 = arith.truncf %7 : vector<8x64xf32> to vector<8x64xbf16>
    %c0_6 = arith.constant 0 : index
    %c0_7 = arith.constant 0 : index
    %9 = vector.load %arg4[%c0_6, %c0_7] : memref<64x32xbf16, #tpu.memory_space<vmem>>, vector<64x32xbf16>
    %cst_8 = arith.constant dense<0.000000e+00> : vector<8x32xf32>
    %10 = tpu.matmul %8, %9, %cst_8 {dimension_numbers = #tpu.dot_dimension_numbers<[1], [0], [0], [1], [0, 0, 1, 1], [], []>} : vector<8x64xbf16>, vector<64x32xbf16>, vector<8x32xf32> -> vector<8x32xf32>
    %c0_9 = arith.constant 0 : index
    %c0_10 = arith.constant 0 : index
    %11 = vector.load %arg5[%c0_9, %c0_10] : memref<24x32xbf16, #tpu.memory_space<vmem>>, vector<24x32xbf16>
    %cst_11 = arith.constant dense<0.000000e+00> : vector<8x32xf32>
    %12 = tpu.matmul %0, %11, %cst_11 {dimension_numbers = #tpu.dot_dimension_numbers<[1], [0], [0], [1], [0, 0, 1, 1], [], []>} : vector<8x24xbf16>, vector<24x32xbf16>, vector<8x32xf32> -> vector<8x32xf32>
    %13 = arith.addf %10, %12 : vector<8x32xf32>
    %c0_12 = arith.constant 0 : index
    %c0_13 = arith.constant 0 : index
    %14 = vector.load %arg6[%c0_12, %c0_13] : memref<1x32xf32, #tpu.memory_space<vmem>>, vector<1x32xf32>
    %15 = vector.broadcast %14 : vector<1x32xf32> to vector<8x32xf32>
    %16 = arith.addf %13, %15 : vector<8x32xf32>
    %cst_14 = arith.constant 0.000000e+00 : f32
    %17 = vector.broadcast %cst_14 : f32 to vector<8x32xf32>
    %18 = arith.maximumf %16, %17 : vector<8x32xf32>
    %19 = arith.truncf %18 : vector<8x32xf32> to vector<8x32xbf16>
    %c0_15 = arith.constant 0 : index
    %c0_16 = arith.constant 0 : index
    %20 = vector.load %arg7[%c0_15, %c0_16] : memref<1x32xbf16, #tpu.memory_space<vmem>>, vector<1x32xbf16>
    "tpu.trace_start"() <{level = 10 : i32, message = "oh,bh->ob"}> : () -> ()
    %cst_17 = arith.constant dense<0.000000e+00> : vector<1x8xf32>
    %21 = tpu.matmul %20, %19, %cst_17 {dimension_numbers = #tpu.dot_dimension_numbers<[1], [1], [0], [0], [0, 0, 1, 0], [], []>} : vector<1x32xbf16>, vector<8x32xbf16>, vector<1x8xf32> -> vector<1x8xf32>
    "tpu.trace_stop"() : () -> ()
    %c0_18 = arith.constant 0 : index
    %c0_19 = arith.constant 0 : index
    %22 = vector.load %arg8[%c0_18, %c0_19] : memref<1x1xf32, #tpu.memory_space<vmem>>, vector<1x1xf32>
    %23 = vector.broadcast %22 : vector<1x1xf32> to vector<1x8xf32>
    %24 = arith.addf %21, %23 : vector<1x8xf32>
    %25 = vector.shape_cast %24 : vector<1x8xf32> to vector<1x1x8xf32>
    %c0_20 = arith.constant 0 : index
    %c0_21 = arith.constant 0 : index
    %c0_22 = arith.constant 0 : index
    %26 = vector.load %arg9[%c0_20, %c0_21, %c0_22] : memref<1x1x8xf32, #tpu.memory_space<vmem>>, vector<1x1x8xf32>
    tpu.vector_store %arg9[%c0_20, %c0_21, %c0_22], %25 {strides = array<i32>} : memref<1x1x8xf32, #tpu.memory_space<vmem>>, vector<1x1x8xf32>,
    return
  }
  func.func @transform_0(%arg0: i32) -> (i32, i32) {
    %c0_i32 = arith.constant 0 : i32
    %c0_i32_0 = arith.constant 0 : i32
    return %arg0, %c0_i32 : i32, i32
  }
  func.func @transform_1(%arg0: i32) -> (i32, i32) {
    %c0_i32 = arith.constant 0 : i32
    %c0_i32_0 = arith.constant 0 : i32
    %c0_i32_1 = arith.constant 0 : i32
    return %c0_i32, %c0_i32_0 : i32, i32
  }
  func.func @transform_2(%arg0: i32) -> (i32, i32) {
    %c0_i32 = arith.constant 0 : i32
    %c0_i32_0 = arith.constant 0 : i32
    %c0_i32_1 = arith.constant 0 : i32
    return %c0_i32, %c0_i32_0 : i32, i32
  }
  func.func @transform_3(%arg0: i32) -> (i32, i32) {
    %c0_i32 = arith.constant 0 : i32
    %c0_i32_0 = arith.constant 0 : i32
    %c0_i32_1 = arith.constant 0 : i32
    return %c0_i32, %c0_i32_0 : i32, i32
  }
  func.func @transform_4(%arg0: i32) -> (i32, i32) {
    %c0_i32 = arith.constant 0 : i32
    %c0_i32_0 = arith.constant 0 : i32
    %c0_i32_1 = arith.constant 0 : i32
    return %c0_i32, %c0_i32_0 : i32, i32
  }
  func.func @transform_5(%arg0: i32) -> (i32, i32) {
    %c0_i32 = arith.constant 0 : i32
    %c0_i32_0 = arith.constant 0 : i32
    %c0_i32_1 = arith.constant 0 : i32
    return %c0_i32, %c0_i32_0 : i32, i32
  }
  func.func @transform_6(%arg0: i32) -> (i32, i32) {
    %c0_i32 = arith.constant 0 : i32
    %c0_i32_0 = arith.constant 0 : i32
    %c0_i32_1 = arith.constant 0 : i32
    return %c0_i32, %c0_i32_0 : i32, i32
  }
  func.func @transform_7(%arg0: i32) -> (i32, i32) {
    %c0_i32 = arith.constant 0 : i32
    %c0_i32_0 = arith.constant 0 : i32
    %c0_i32_1 = arith.constant 0 : i32
    return %c0_i32, %c0_i32_0 : i32, i32
  }
  func.func @transform_8(%arg0: i32) -> (i32, i32, i32) {
    %c0_i32 = arith.constant 0 : i32
    %c0_i32_0 = arith.constant 0 : i32
    %c0_i32_1 = arith.constant 0 : i32
    return %arg0, %c0_i32, %c0_i32_0 : i32, i32, i32
  }
}

</mosaic_0001>

<llo_original>
// kernel: critic_forward.1
$region0: #{critic_forward.1}
  #allocation0 [shape = 'u32[]', space=smem, size = 0x4, offset = 0x4, fixed_abs, tag = 'smem constant byte address 0x4 - core index']
  #allocation1 [shape = 'u32[144,128]{1,0:T(1,128)}', space=vmem, size = 0x12000, scoped, tag = 'internal scratch']
  #allocation2 [shape = 'f32[1,1]{1,0:T(1,128)S(1)}', space=vmem, size = 0x200, scoped, tag = 'scoped memory for critic_forward.1']
  %s0 = inlined_call_operand.vmem [shape: bf16[24,24], index: 0, kind: input, shape index: {}]
  %s1 = inlined_call_operand.vmem [shape: bf16[24,64], index: 1, kind: input, shape index: {}]
  %s2 = inlined_call_operand.vmem [shape: f32[1,64], index: 2, kind: input, shape index: {}]
  %s3 = inlined_call_operand.vmem [shape: bf16[64,32], index: 3, kind: input, shape index: {}]
  %s4 = inlined_call_operand.vmem [shape: bf16[24,32], index: 4, kind: input, shape index: {}]
  %s5 = inlined_call_operand.vmem [shape: f32[1,32], index: 5, kind: input, shape index: {}]
  %s6 = inlined_call_operand.vmem [shape: bf16[1,32], index: 6, kind: input, shape index: {}]
  %s7 = inlined_call_operand.<no memory space> [shape: f32[1,1], index: 7, kind: input, shape index: {}]
  %s8 = inlined_call_operand.vmem [shape: f32[3,1,8], index: 8, kind: output, shape index: {}]
  %s9 = sld [smem:[#allocation0]]
  $region65: #{critic_forward.1} parent=0
    _
  %s11 = ssub.s32 1, %s9
  %s12 = scalar_select 0, %s11, %s9
  %v13 = vstv %s7
  %14 = vst [vmem:[#allocation2] sm:$0x1] %v13
  loop: start=0, step=1, limit=5
  $region2: #{critic_forward.1} parent=0 // loop_pre_header
    _
  $region3: #{critic_forward.1} parent=0 // loop_header
    %s16 = sphi 0, %s20
    %p17 = scmp.ge.s32.totalorder %s16, 5
    %s26 = sphi 0, %s28
    %s29 = sphi 0, %s26
    %s30 = sphi 0, %s29
    %s46 = sphi 0, %s30
    %s50 = sphi 0, %s50
    %s52 = sphi 0, %s50
    %s53 = sphi 0, %s52
    %s67 = sphi 0, %s53
    %s71 = sphi 0, %s71
    %s73 = sphi 0, %s71
    %s74 = sphi 0, %s73
    %s88 = sphi 0, %s74
    %s92 = sphi 0, %s92
    %s94 = sphi 0, %s92
    %s95 = sphi 0, %s94
    %s109 = sphi 0, %s95
    %s113 = sphi 0, %s113
    %s115 = sphi 0, %s113
    %s116 = sphi 0, %s115
    %s130 = sphi 0, %s116
    %s134 = sphi 0, %s134
    %s136 = sphi 0, %s134
    %s137 = sphi 0, %s136
    %s151 = sphi 0, %s137
    %s155 = sphi 0, %s155
    %s157 = sphi 0, %s155
    %s158 = sphi 0, %s157
    %s172 = sphi 0, %s158
    %s176 = sphi 0, %s176
    %s178 = sphi 0, %s176
    %s179 = sphi 0, %s178
    %s193 = sphi 0, %s179
    %s199 = sphi 0, %s201
    %s202 = sphi 0, %s199
    %s203 = sphi 0, %s202
    %s219 = sphi 0, %s203
  $region4: #{critic_forward.1} parent=0 // loop_header_branch
    %19 = sbr.rel (%p17) target = $region8
  $region5: #{critic_forward.1} parent=0 // loop_body
    %s21 = ssub.s32 %s16, 1
    %s22 = ssub.s32 %s16, 2
    %s23 = sadd.s32 %s16, 1
    %s24 = ssub.s32 %s16, %s23
    %p25 = scmp.eq.s32.totalorder %s24, 0
    %s27 = sadd.s32 %s26, 1
    %s28 = scalar_select %p25, %s26, %s27
    %p31 = pneg %p25
    %p32 = scmp.eq.s32.totalorder %s16, 2
    %p33 = por %p31, %p32
    %p34 = scmp.ne.s32.totalorder %s26, %s29
    %p35 = scmp.eq.s32.totalorder %s16, 0
    %p36 = por %p34, %p35
    %p37 = scmp.ne.s32.totalorder %s26, %s29
    %p38 = scmp.eq.s32.totalorder %s21, 2
    %p39 = por %p37, %p38
    %p40 = scmp.ne.s32.totalorder %s29, %s30
    %p41 = scmp.eq.s32.totalorder %s21, 0
    %p42 = por %p40, %p41
    %p43 = scmp.ne.s32.totalorder %s29, %s30
    %p44 = scmp.eq.s32.totalorder %s22, 2
    %p45 = por %p43, %p44
    %p47 = scmp.ne.s32.totalorder %s30, %s46
    %p48 = scmp.eq.s32.totalorder %s22, 0
    %p49 = por %p47, %p48
    %s51 = sadd.s32 %s50, 1
    %p54 = scmp.eq.s32.totalorder %s16, 2
    %p55 = scmp.ne.s32.totalorder %s50, %s52
    %p56 = scmp.eq.s32.totalorder %s16, 0
    %p57 = por %p55, %p56
    %p58 = scmp.ne.s32.totalorder %s50, %s52
    %p59 = scmp.eq.s32.totalorder %s21, 2
    %p60 = por %p58, %p59
    %p61 = scmp.ne.s32.totalorder %s52, %s53
    %p62 = scmp.eq.s32.totalorder %s21, 0
    %p63 = por %p61, %p62
    %p64 = scmp.ne.s32.totalorder %s52, %s53
    %p65 = scmp.eq.s32.totalorder %s22, 2
    %p66 = por %p64, %p65
    %p68 = scmp.ne.s32.totalorder %s53, %s67
    %p69 = scmp.eq.s32.totalorder %s22, 0
    %p70 = por %p68, %p69
    %s72 = sadd.s32 %s71, 1
    %p75 = scmp.eq.s32.totalorder %s16, 2
    %p76 = scmp.ne.s32.totalorder %s71, %s73
    %p77 = scmp.eq.s32.totalorder %s16, 0
    %p78 = por %p76, %p77
    %p79 = scmp.ne.s32.totalorder %s71, %s73
    %p80 = scmp.eq.s32.totalorder %s21, 2
    %p81 = por %p79, %p80
    %p82 = scmp.ne.s32.totalorder %s73, %s74
    %p83 = scmp.eq.s32.totalorder %s21, 0
    %p84 = por %p82, %p83
    %p85 = scmp.ne.s32.totalorder %s73, %s74
    %p86 = scmp.eq.s32.totalorder %s22, 2
    %p87 = por %p85, %p86
    %p89 = scmp.ne.s32.totalorder %s74, %s88
    %p90 = scmp.eq.s32.totalorder %s22, 0
    %p91 = por %p89, %p90
    %s93 = sadd.s32 %s92, 1
    %p96 = scmp.eq.s32.totalorder %s16, 2
    %p97 = scmp.ne.s32.totalorder %s92, %s94
    %p98 = scmp.eq.s32.totalorder %s16, 0
    %p99 = por %p97, %p98
    %p100 = scmp.ne.s32.totalorder %s92, %s94
    %p101 = scmp.eq.s32.totalorder %s21, 2
    %p102 = por %p100, %p101
    %p103 = scmp.ne.s32.totalorder %s94, %s95
    %p104 = scmp.eq.s32.totalorder %s21, 0
    %p105 = por %p103, %p104
    %p106 = scmp.ne.s32.totalorder %s94, %s95
    %p107 = scmp.eq.s32.totalorder %s22, 2
    %p108 = por %p106, %p107
    %p110 = scmp.ne.s32.totalorder %s95, %s109
    %p111 = scmp.eq.s32.totalorder %s22, 0
    %p112 = por %p110, %p111
    %s114 = sadd.s32 %s113, 1
    %p117 = scmp.eq.s32.totalorder %s16, 2
    %p118 = scmp.ne.s32.totalorder %s113, %s115
    %p119 = scmp.eq.s32.totalorder %s16, 0
    %p120 = por %p118, %p119
    %p121 = scmp.ne.s32.totalorder %s113, %s115
    %p122 = scmp.eq.s32.totalorder %s21, 2
    %p123 = por %p121, %p122
    %p124 = scmp.ne.s32.totalorder %s115, %s116
    %p125 = scmp.eq.s32.totalorder %s21, 0
    %p126 = por %p124, %p125
    %p127 = scmp.ne.s32.totalorder %s115, %s116
    %p128 = scmp.eq.s32.totalorder %s22, 2
    %p129 = por %p127, %p128
    %p131 = scmp.ne.s32.totalorder %s116, %s130
    %p132 = scmp.eq.s32.totalorder %s22, 0
    %p133 = por %p131, %p132
    %s135 = sadd.s32 %s134, 1
    %p138 = scmp.eq.s32.totalorder %s16, 2
    %p139 = scmp.ne.s32.totalorder %s134, %s136
    %p140 = scmp.eq.s32.totalorder %s16, 0
    %p141 = por %p139, %p140
    %p142 = scmp.ne.s32.totalorder %s134, %s136
    %p143 = scmp.eq.s32.totalorder %s21, 2
    %p144 = por %p142, %p143
    %p145 = scmp.ne.s32.totalorder %s136, %s137
    %p146 = scmp.eq.s32.totalorder %s21, 0
    %p147 = por %p145, %p146
    %p148 = scmp.ne.s32.totalorder %s136, %s137
    %p149 = scmp.eq.s32.totalorder %s22, 2
    %p150 = por %p148, %p149
    %p152 = scmp.ne.s32.totalorder %s137, %s151
    %p153 = scmp.eq.s32.totalorder %s22, 0
    %p154 = por %p152, %p153
    %s156 = sadd.s32 %s155, 1
    %p159 = scmp.eq.s32.totalorder %s16, 2
    %p160 = scmp.ne.s32.totalorder %s155, %s157
    %p161 = scmp.eq.s32.totalorder %s16, 0
    %p162 = por %p160, %p161
    %p163 = scmp.ne.s32.totalorder %s155, %s157
    %p164 = scmp.eq.s32.totalorder %s21, 2
    %p165 = por %p163, %p164
    %p166 = scmp.ne.s32.totalorder %s157, %s158
    %p167 = scmp.eq.s32.totalorder %s21, 0
    %p168 = por %p166, %p167
    %p169 = scmp.ne.s32.totalorder %s157, %s158
    %p170 = scmp.eq.s32.totalorder %s22, 2
    %p171 = por %p169, %p170
    %p173 = scmp.ne.s32.totalorder %s158, %s172
    %p174 = scmp.eq.s32.totalorder %s22, 0
    %p175 = por %p173, %p174
    %s177 = sadd.s32 %s176, 1
    %p180 = scmp.eq.s32.totalorder %s16, 2
    %p181 = scmp.ne.s32.totalorder %s176, %s178
    %p182 = scmp.eq.s32.totalorder %s16, 0
    %p183 = por %p181, %p182
    %p184 = scmp.ne.s32.totalorder %s176, %s178
    %p185 = scmp.eq.s32.totalorder %s21, 2
    %p186 = por %p184, %p185
    %p187 = scmp.ne.s32.totalorder %s178, %s179
    %p188 = scmp.eq.s32.totalorder %s21, 0
    %p189 = por %p187, %p188
    %p190 = scmp.ne.s32.totalorder %s178, %s179
    %p191 = scmp.eq.s32.totalorder %s22, 2
    %p192 = por %p190, %p191
    %p194 = scmp.ne.s32.totalorder %s179, %s193
    %p195 = scmp.eq.s32.totalorder %s22, 0
    %p196 = por %p194, %p195
    %s197 = ssub.s32 %s16, %s23
    %p198 = scmp.eq.s32.totalorder %s197, 0
    %s200 = sadd.s32 %s199, 1
    %s201 = scalar_select %p198, %s199, %s200
    %p204 = pneg %p198
    %p205 = scmp.eq.s32.totalorder %s16, 2
    %p206 = por %p204, %p205
    %p207 = scmp.ne.s32.totalorder %s199, %s202
    %p208 = scmp.eq.s32.totalorder %s16, 0
    %p209 = por %p207, %p208
    %p210 = scmp.ne.s32.totalorder %s199, %s202
    %p211 = scmp.eq.s32.totalorder %s21, 2
    %p212 = por %p210, %p211
    %p213 = scmp.ne.s32.totalorder %s202, %s203
    %p214 = scmp.eq.s32.totalorder %s21, 0
    %p215 = por %p213, %p214
    %p216 = scmp.ne.s32.totalorder %s202, %s203
    %p217 = scmp.eq.s32.totalorder %s22, 2
    %p218 = por %p216, %p217
    %p220 = scmp.ne.s32.totalorder %s203, %s219
    %p221 = scmp.eq.s32.totalorder %s22, 0
    %p222 = por %p220, %p221
    %p223 = scmp.le.s32.totalorder 1, %s16
    %p224 = scmp.lt.s32.totalorder %s16, 4
    %p225 = pnand %p223, %p224
    %p226 = pneg %p225
    // Predicated region
    $region9: #{critic_forward.1} parent=5 // pred_check
      _
    $region10: #{critic_forward.1} parent=5 // pred_check_branch
      %228 = sbr.rel (%p225) target = $region12
    $region11: #{critic_forward.1} parent=5 // pred_region
      %s229 = ssub.s32 %s16, 1
      // Predicated region
      $region13: #{critic_forward.1} parent=11 // pred_check
        %p230 = pneg %p63
      $region14: #{critic_forward.1} parent=11 // pred_check_branch
        %232 = sbr.rel (%p230) target = $region16
      $region15: #{critic_forward.1} parent=11 // pred_region
        _
      $region16: #{critic_forward.1} parent=11 // pred_fallthru
        _
      // Predicated region
      $region17: #{critic_forward.1} parent=11 // pred_check
        %p233 = pneg %p84
      $region18: #{critic_forward.1} parent=11 // pred_check_branch
        %235 = sbr.rel (%p233) target = $region20
      $region19: #{critic_forward.1} parent=11 // pred_region
        _
      $region20: #{critic_forward.1} parent=11 // pred_fallthru
        _
      // Predicated region
      $region21: #{critic_forward.1} parent=11 // pred_check
        %p236 = pneg %p105
      $region22: #{critic_forward.1} parent=11 // pred_check_branch
        %238 = sbr.rel (%p236) target = $region24
      $region23: #{critic_forward.1} parent=11 // pred_region
        _
      $region24: #{critic_forward.1} parent=11 // pred_fallthru
        _
      // Predicated region
      $region25: #{critic_forward.1} parent=11 // pred_check
        %p239 = pneg %p126
      $region26: #{critic_forward.1} parent=11 // pred_check_branch
        %241 = sbr.rel (%p239) target = $region28
      $region27: #{critic_forward.1} parent=11 // pred_region
        _
      $region28: #{critic_forward.1} parent=11 // pred_fallthru
        _
      // Predicated region
      $region29: #{critic_forward.1} parent=11 // pred_check
        %p242 = pneg %p147
      $region30: #{critic_forward.1} parent=11 // pred_check_branch
        %244 = sbr.rel (%p242) target = $region32
      $region31: #{critic_forward.1} parent=11 // pred_region
        _
      $region32: #{critic_forward.1} parent=11 // pred_fallthru
        _
      // Predicated region
      $region33: #{critic_forward.1} parent=11 // pred_check
        %p245 = pneg %p168
      $region34: #{critic_forward.1} parent=11 // pred_check_branch
        %247 = sbr.rel (%p245) target = $region36
      $region35: #{critic_forward.1} parent=11 // pred_region
        _
      $region36: #{critic_forward.1} parent=11 // pred_fallthru
        _
      // Predicated region
      $region37: #{critic_forward.1} parent=11 // pred_check
        %p248 = pneg %p189
      $region38: #{critic_forward.1} parent=11 // pred_check_branch
        %250 = sbr.rel (%p248) target = $region40
      $region39: #{critic_forward.1} parent=11 // pred_region
        _
      $region40: #{critic_forward.1} parent=11 // pred_fallthru
        _
    $region12: #{critic_forward.1} parent=5 // pred_fallthru
      _
    %p251 = scmp.lt.s32.totalorder %s16, 3
    // Predicated region
    $region41: #{critic_forward.1} parent=5 // pred_check
      %p252 = pneg %p251
    $region42: #{critic_forward.1} parent=5 // pred_check_branch
      %254 = sbr.rel (%p252) target = $region44
    $region43: #{critic_forward.1} parent=5 // pred_region
      // Predicated region
      $region45: #{critic_forward.1} parent=43 // pred_check
        %p255 = pneg %p36
      $region46: #{critic_forward.1} parent=43 // pred_check_branch
        %257 = sbr.rel (%p255) target = $region48
      $region47: #{critic_forward.1} parent=43 // pred_region
        %p258 = scmp.lt.s32.totalorder %s16, 2
        %s259 = scalar_select %p258, %s16, 2
        %s260 = smul.addr %s259, 4
        %s261 = scalar_lea.vmem %s0, %s260
      $region48: #{critic_forward.1} parent=43 // pred_fallthru
        _
    $region44: #{critic_forward.1} parent=5 // pred_fallthru
      _
    %p262 = scmp.le.s32.totalorder 1, %s16
    %p263 = scmp.lt.s32.totalorder %s16, 4
    %p264 = pnand %p262, %p263
    %p265 = pneg %p264
    // Predicated region
    $region49: #{critic_forward.1} parent=5 // pred_check
      _
    $region50: #{critic_forward.1} parent=5 // pred_check_branch
      %267 = sbr.rel (%p264) target = $region52
    $region51: #{critic_forward.1} parent=5 // pred_region
      %s268 = ssub.s32 %s16, 1
      %p269 = scmp.lt.s32.totalorder %s21, 2
      %s270 = scalar_select %p269, %s21, 2
      %s271 = smul.addr %s270, 4
      %s272 = scalar_lea.vmem %s0, %s271
      %p273 = pneg %p42
      %p274 = pneg %p39
      %p275 = pneg %p63
      %p276 = pneg %p60
      %p277 = pneg %p84
      %p278 = pneg %p81
      %p279 = pneg %p105
      %p280 = pneg %p102
      %p281 = pneg %p126
      %p282 = pneg %p123
      %p283 = pneg %p147
      %p284 = pneg %p144
      %p285 = pneg %p168
      %p286 = pneg %p165
      %p287 = pneg %p189
      %p288 = pneg %p186
      %p289 = pneg %p215
      %p290 = pneg %p212
      %p291 = scmp.lt.s32.totalorder %s21, 2
      %s292 = scalar_select %p291, %s21, 2
      %s293 = scalar_lea.vmem %s8, %s292
      %p294 = scmp.lt.s32.totalorder %s21, 2
      %s295 = scalar_select %p294, %s21, 2
      %s296 = smul.addr %s295, 4
      %s297 = scalar_lea.vmem %s0, %s296
      %p298 = scmp.lt.s32.totalorder %s21, 2
      %s299 = scalar_select %p298, %s21, 2
      %s300 = scalar_lea.vmem %s8, %s299
      %v302 = vld [vmem:[%s297] sm:$0xf]
      %v303 = vld [vmem:[%s1] sm:$0xf]
      %v304 = vld [vmem:[%s1 + $0x4] sm:$0xf]
      %v305 = vld [vmem:[%s1 + $0x8] sm:$0xf]
      %v306 = vld [vmem:[%s2] sm:$0x1]
      %v308 = vlaneseq
      %v309 = vshrl.u32 %v308, 7
      %v310 = vsub.s32 0, %v309
      %v311 = vrot.slane %v306, %v310
      %v316 = vunpack.c.l.b16 %v303
      %v317 = vunpack.c.l.b16 %v304
      %v318 = vunpack.c.l.b16 %v305
      %v319 = vpack.c.b16 %v317, %v316
      %v320 = vpack.c.b16 %v318, %v318
      %vm322 = vcmask 195584
      %v324 = vsel %vm322, %v302, 0
      %vm326 = vcmask 1043456
      %v328 = vsel %vm326, %v320, 0
      %330 = vmatprep.subr.bf16.mxu0 0
      %331 = vmatpush1.bf16.msra.mxu0 0
      %332 = vmatprep.subr.bf16.mxu0 0
      %333 = vmatpush1.bf16.msra.mxu0 0
      %334 = vmatprep.subr.bf16.mxu0 0
      %335 = vmatpush1.bf16.msra.mxu0 0
      %336 = vmatprep.subr.bf16.mxu0 0
      %337 = vmatpush1.bf16.msra.mxu0 0
      %338 = vmatprep.subr.bf16.mxu0 0
      %339 = vmatpush1.bf16.msra.mxu0 0
      %340 = vmatprep.subr.bf16.mxu0 0
      %341 = vmatpush1.bf16.msra.mxu0 0
      %342 = vmatprep.subr.bf16.mxu0 0
      %343 = vmatpush1.bf16.msra.mxu0 %v328
      %344 = vmatprep.subr.bf16.mxu0 0
      %345 = vmatpush1.bf16.msra.mxu0 %v319
      %346 = vmatprep.subr.bf16.mxu0 0
      %347 = vmatpush2.bf16.msra.mxu0 0
      %348 = vmatprep.subr.bf16.mxu0 0
      %349 = vmatpush2.bf16.msra.mxu0 0
      %350 = vmatprep.subr.bf16.mxu0 0
      %351 = vmatpush2.bf16.msra.mxu0 0
      %352 = vmatprep.subr.bf16.mxu0 0
      %353 = vmatpush2.bf16.msra.mxu0 0
      %354 = vmatprep.subr.bf16.mxu0 0
      %355 = vmatpush2.bf16.msra.mxu0 0
      %356 = vmatprep.subr.bf16.mxu0 0
      %357 = vmatpush2.bf16.msra.mxu0 0
      %358 = vmatprep.subr.bf16.mxu0 0
      %359 = vmatpush2.bf16.msra.mxu0 0
      %360 = vmatprep.subr.bf16.mxu0 0
      %361 = vmatpush2.bf16.msra.mxu0 0
      %362 = vmatprep.mubr.bf16.mxu0 0
      %363 = vmatmul.mubr.bf16.gmra.mxu0 %v324
      %v364 = vpop.f32.mrf.mxu0
      %v365 = vadd.f32 %v311, %v364
      %v366 = vpop.f32.mrf.mxu0
      %v367 = vpop.f32.mrf.mxu0
      %v368 = vpop.f32.mrf.mxu0
      %369 = vdwg.mxu0
      %v370 = vmax.f32 %v365, 0.0
      %v371 = vpack.c.bf16 %v370, %v370
      %v372 = vld [vmem:[%s3] sm:$0xf]
      %v373 = vld [vmem:[%s3 + $0x4] sm:$0xf]
      %v374 = vld [vmem:[%s3 + $0x8] sm:$0xf]
      %v375 = vld [vmem:[%s3 + $0xc] sm:$0xf]
      %v376 = vld [vmem:[%s3 + $0x10] sm:$0xf]
      %v377 = vld [vmem:[%s3 + $0x14] sm:$0xf]
      %v378 = vld [vmem:[%s3 + $0x18] sm:$0xf]
      %v379 = vld [vmem:[%s3 + $0x1c] sm:$0xf]
      %v380 = vld [vmem:[%s4] sm:$0xf]
      %v381 = vld [vmem:[%s4 + $0x4] sm:$0xf]
      %v382 = vld [vmem:[%s4 + $0x8] sm:$0xf]
      %v386 = vunpack.c.l.b16 %v380
      %v387 = vunpack.c.l.b16 %v381
      %v388 = vunpack.c.l.b16 %v382
      %v389 = vpack.c.b16 %v387, %v386
      %v390 = vpack.c.b16 %v388, %v388
      %v393 = vsel %vm326, %v390, 0
      %395 = vmatprep.subr.bf16.mxu0 0
      %396 = vmatpush1.bf16.msra.mxu0 0
      %397 = vmatprep.subr.bf16.mxu0 0
      %398 = vmatpush1.bf16.msra.mxu0 0
      %399 = vmatprep.subr.bf16.mxu0 0
      %400 = vmatpush1.bf16.msra.mxu0 0
      %401 = vmatprep.subr.bf16.mxu0 0
      %402 = vmatpush1.bf16.msra.mxu0 0
      %403 = vmatprep.subr.bf16.mxu0 0
      %404 = vmatpush1.bf16.msra.mxu0 0
      %405 = vmatprep.subr.bf16.mxu0 0
      %406 = vmatpush1.bf16.msra.mxu0 0
      %407 = vmatprep.subr.bf16.mxu0 0
      %408 = vmatpush1.bf16.msra.mxu0 %v393
      %409 = vmatprep.subr.bf16.mxu0 0
      %410 = vmatpush1.bf16.msra.mxu0 %v389
      %411 = vmatprep.subr.bf16.mxu0 0
      %412 = vmatpush2.bf16.msra.mxu0 0
      %413 = vmatprep.subr.bf16.mxu0 0
      %414 = vmatpush2.bf16.msra.mxu0 0
      %415 = vmatprep.subr.bf16.mxu0 0
      %416 = vmatpush2.bf16.msra.mxu0 0
      %417 = vmatprep.subr.bf16.mxu0 0
      %418 = vmatpush2.bf16.msra.mxu0 0
      %419 = vmatprep.subr.bf16.mxu0 0
      %420 = vmatpush2.bf16.msra.mxu0 0
      %421 = vmatprep.subr.bf16.mxu0 0
      %422 = vmatpush2.bf16.msra.mxu0 0
      %423 = vmatprep.subr.bf16.mxu0 0
      %424 = vmatpush2.bf16.msra.mxu0 0
      %425 = vmatprep.subr.bf16.mxu0 0
      %426 = vmatpush2.bf16.msra.mxu0 0
      %427 = vmatprep.mubr.bf16.mxu0 0
      %428 = vmatmul.mubr.bf16.gmra.mxu0 %v324
      %v429 = vpop.f32.mrf.mxu0
      %v430 = vadd.f32 0.0, %v429
      %v431 = vpop.f32.mrf.mxu0
      %v432 = vpop.f32.mrf.mxu0
      %v433 = vpop.f32.mrf.mxu0
      %434 = vdwg.mxu0
      %v443 = vunpack.c.l.b16 %v372
      %v444 = vunpack.c.l.b16 %v373
      %v445 = vunpack.c.l.b16 %v374
      %v446 = vunpack.c.l.b16 %v375
      %v447 = vunpack.c.l.b16 %v376
      %v448 = vunpack.c.l.b16 %v377
      %v449 = vunpack.c.l.b16 %v378
      %v450 = vunpack.c.l.b16 %v379
      %v451 = vpack.c.b16 %v444, %v443
      %v452 = vpack.c.b16 %v446, %v445
      %v453 = vpack.c.b16 %v448, %v447
      %v454 = vpack.c.b16 %v450, %v449
      %vm459 = vcmask 523264
      %v461 = vsel %vm459, %v371, 0
      %463 = vmatprep.subr.bf16.mxu0 0
      %464 = vmatpush1.bf16.msra.mxu0 0
      %465 = vmatprep.subr.bf16.mxu0 0
      %466 = vmatpush1.bf16.msra.mxu0 0
      %467 = vmatprep.subr.bf16.mxu0 0
      %468 = vmatpush1.bf16.msra.mxu0 0
      %469 = vmatprep.subr.bf16.mxu0 0
      %470 = vmatpush1.bf16.msra.mxu0 0
      %471 = vmatprep.subr.bf16.mxu0 0
      %472 = vmatpush1.bf16.msra.mxu0 %v454
      %473 = vmatprep.subr.bf16.mxu0 0
      %474 = vmatpush1.bf16.msra.mxu0 %v453
      %475 = vmatprep.subr.bf16.mxu0 0
      %476 = vmatpush1.bf16.msra.mxu0 %v452
      %477 = vmatprep.subr.bf16.mxu0 0
      %478 = vmatpush1.bf16.msra.mxu0 %v451
      %479 = vmatprep.subr.bf16.mxu0 0
      %480 = vmatpush2.bf16.msra.mxu0 0
      %481 = vmatprep.subr.bf16.mxu0 0
      %482 = vmatpush2.bf16.msra.mxu0 0
      %483 = vmatprep.subr.bf16.mxu0 0
      %484 = vmatpush2.bf16.msra.mxu0 0
      %485 = vmatprep.subr.bf16.mxu0 0
      %486 = vmatpush2.bf16.msra.mxu0 0
      %487 = vmatprep.subr.bf16.mxu0 0
      %488 = vmatpush2.bf16.msra.mxu0 0
      %489 = vmatprep.subr.bf16.mxu0 0
      %490 = vmatpush2.bf16.msra.mxu0 0
      %491 = vmatprep.subr.bf16.mxu0 0
      %492 = vmatpush2.bf16.msra.mxu0 0
      %493 = vmatprep.subr.bf16.mxu0 0
      %494 = vmatpush2.bf16.msra.mxu0 0
      %495 = vmatprep.mubr.bf16.mxu0 0
      %496 = vmatmul.mubr.bf16.gmra.mxu0 %v461
      %v497 = vpop.f32.mrf.mxu0
      %v498 = vadd.f32 %v430, %v497
      %v499 = vpop.f32.mrf.mxu0
      %v500 = vpop.f32.mrf.mxu0
      %v501 = vpop.f32.mrf.mxu0
      %502 = vdwg.mxu0
      %v503 = vld [vmem:[%s5] sm:$0x1]
      %v505 = vlaneseq
      %v506 = vshrl.u32 %v505, 7
      %v507 = vsub.s32 0, %v506
      %v508 = vrot.slane %v503, %v507
      %v510 = vadd.f32 %v498, %v508
      %v511 = vmax.f32 %v510, 0.0
      %v512 = vpack.c.bf16 %v511, %v511
      %v513 = vld [vmem:[%s6] sm:$0x1]
      %v514 = vld [vmem:[#allocation2] sm:$0x1]
      %516 = vset.pattern.permute.xlu0 0
      %517 = vperm.xlu0 %516, %v514
      %v518 = vpop.permute.xlu0 %517
      %v520 = vlaneseq
      %v521 = vshrl.u32 %v520, 7
      %v522 = vsub.s32 0, %v521
      %v523 = vrot.slane %v518, %v522
      %vm524 = vcmask 261120
      %v526 = vsel %vm524, %v513, 0
      %v529 = vsel %vm524, %v512, 0
      %531 = vmatprep.subr.bf16.mxu0 0
      %532 = vmatpush1.bf16.xpose.msra.mxu0 0
      %533 = vmatprep.subr.bf16.mxu0 0
      %534 = vmatpush1.bf16.xpose.msra.mxu0 0
      %535 = vmatprep.subr.bf16.mxu0 0
      %536 = vmatpush1.bf16.xpose.msra.mxu0 0
      %537 = vmatprep.subr.bf16.mxu0 0
      %538 = vmatpush1.bf16.xpose.msra.mxu0 0
      %539 = vmatprep.subr.bf16.mxu0 0
      %540 = vmatpush1.bf16.xpose.msra.mxu0 0
      %541 = vmatprep.subr.bf16.mxu0 0
      %542 = vmatpush1.bf16.xpose.msra.mxu0 0
      %543 = vmatprep.subr.bf16.mxu0 0
      %544 = vmatpush1.bf16.xpose.msra.mxu0 0
      %545 = vmatprep.subr.bf16.mxu0 0
      %546 = vmatpush1.bf16.xpose.msra.mxu0 %v529
      %547 = vmatprep.subr.bf16.mxu0 0
      %548 = vmatpush2.bf16.xpose.msra.mxu0 0
      %549 = vmatprep.subr.bf16.mxu0 0
      %550 = vmatpush2.bf16.xpose.msra.mxu0 0
      %551 = vmatprep.subr.bf16.mxu0 0
      %552 = vmatpush2.bf16.xpose.msra.mxu0 0
      %553 = vmatprep.subr.bf16.mxu0 0
      %554 = vmatpush2.bf16.xpose.msra.mxu0 0
      %555 = vmatprep.subr.bf16.mxu0 0
      %556 = vmatpush2.bf16.xpose.msra.mxu0 0
      %557 = vmatprep.subr.bf16.mxu0 0
      %558 = vmatpush2.bf16.xpose.msra.mxu0 0
      %559 = vmatprep.subr.bf16.mxu0 0
      %560 = vmatpush2.bf16.xpose.msra.mxu0 0
      %561 = vmatprep.subr.bf16.mxu0 0
      %562 = vmatpush2.bf16.xpose.msra.mxu0 0
      %563 = vmatprep.mubr.bf16.mxu0 0
      %564 = vmatmul.mubr.bf16.gmra.mxu0 %v526
      %v565 = vpop.f32.mrf.mxu0
      %v566 = vadd.f32 %v523, %v565
      %v567 = vpop.f32.mrf.mxu0
      %v568 = vpop.f32.mrf.mxu0
      %v569 = vpop.f32.mrf.mxu0
      %570 = vdwg.mxu0
      %vm571 = vcmask 57344
      %572 = vst.msk [vmem:[%s300] sm:$0x1] %vm571, %v566
      %p573 = scmp.lt.s32.totalorder %s21, 2
      %s574 = scalar_select %p573, %s21, 2
      %s575 = scalar_lea.vmem %s8, %s574
      // Predicated region
      $region53: #{critic_forward.1} parent=51 // pred_check
        %p576 = pneg %p212
      $region54: #{critic_forward.1} parent=51 // pred_check_branch
        %578 = sbr.rel (%p576) target = $region56
      $region55: #{critic_forward.1} parent=51 // pred_region
        _
      $region56: #{critic_forward.1} parent=51 // pred_fallthru
        _
    $region52: #{critic_forward.1} parent=5 // pred_fallthru
      _
    %p579 = scmp.le.s32.totalorder 2, %s16
    // Predicated region
    $region57: #{critic_forward.1} parent=5 // pred_check
      %p580 = pneg %p579
    $region58: #{critic_forward.1} parent=5 // pred_check_branch
      %582 = sbr.rel (%p580) target = $region60
    $region59: #{critic_forward.1} parent=5 // pred_region
      %s583 = ssub.s32 %s16, 2
      // Predicated region
      $region61: #{critic_forward.1} parent=59 // pred_check
        %p584 = pneg %p218
      $region62: #{critic_forward.1} parent=59 // pred_check_branch
        %586 = sbr.rel (%p584) target = $region64
      $region63: #{critic_forward.1} parent=59 // pred_region
        %p587 = scmp.lt.s32.totalorder %s22, 2
        %s588 = scalar_select %p587, %s22, 2
        %s589 = scalar_lea.vmem %s8, %s588
      $region64: #{critic_forward.1} parent=59 // pred_fallthru
        _
    $region60: #{critic_forward.1} parent=5 // pred_fallthru
      _
  $region6: #{critic_forward.1} parent=0 // loop_footer
    %s20 = sadd.s32 1, %s16
  $region7: #{critic_forward.1} parent=0 // loop_footer_branch
    %15 = sbr.rel target = $region3
  $region8: #{critic_forward.1} parent=0 // loop_exit
    _

</llo_original>
